<compile_context>
chip_gen: v6e
topology: v6e:2x2x1
jax: 0.10.0
libtpu: 0.0.40
codegen_flags: <defaults>
</compile_context>

<pallas_src>
import functools

import jax
import jax.numpy as jnp
from jax import lax
from jax.experimental import pallas as pl
from jax.experimental.pallas import tpu as pltpu

LANE = 128
SUBLANE = 8


def _piecewise(diff, beta):
    # fused: d*d*(0.5/beta) avoids a per-element divide.
    return jnp.where(diff < beta, diff * diff * (0.5 / beta), diff - 0.5 * beta)


def _smooth_l1_kernel(pred_ref, gt_ref, *rest, beta, rows, tm, steps,
                      has_mask, mask_abs):
    """Grid = (P, steps). Inner axis is the reduction; the (1,8,128) output
    block(s) for slice p act as resident accumulators."""
    if has_mask:
        mask_ref, loss_ref, msum_ref = rest
    else:
        (loss_ref,) = rest
        mask_ref = msum_ref = None

    p = pl.program_id(0)
    i = pl.program_id(1)

    @pl.when(i == 0)
    def _():
        loss_ref[...] = jnp.zeros_like(loss_ref)
        if has_mask:
            msum_ref[...] = jnp.zeros_like(msum_ref)

    # Rows of this tile that lie inside the real array. `flat_block` is
    # intentionally un-clamped so duplicated overhang tiles (the index_map
    # clamps the DMA) see rem_rows <= 0 and contribute nothing.
    flat_block = p * steps + i
    rem_rows = rows - flat_block * tm        # row-level -> no int32 overflow

    def _compute(row_valid):
        pred = pred_ref[...].astype(jnp.float32)
        gt = gt_ref[...].astype(jnp.float32)
        if has_mask:
            m = mask_ref[...].astype(jnp.float32)
            am = jnp.abs(m) if mask_abs else m
            # |pred*m - gt*m| == |pred - gt| * |m| exactly for any real mask.
            diff = jnp.abs(pred - gt) * am
        else:
            m = None
            diff = jnp.abs(pred - gt)
        loss = _piecewise(diff, beta)
        if row_valid is not None:
            loss = jnp.where(row_valid, loss, 0.0)   # select: garbage/NaN safe
        # VPU-only partial reduce into the vreg-shaped (8,128) accumulator.
        loss_ref[...] += loss.reshape(tm // SUBLANE, SUBLANE, LANE).sum(axis=0)[None]
        if has_mask:
            if row_valid is not None:
                m = jnp.where(row_valid, m, 0.0)
            msum_ref[...] += m.reshape(tm // SUBLANE, SUBLANE, LANE).sum(axis=0)[None]

    # Hot path: full tile, zero masking overhead.
    @pl.when(rem_rows >= tm)
    def _():
        _compute(None)

    # Cold path: partial last tile of this slice, or a duplicated overhang
    # tile (rem_rows <= 0). Only here do we pay for the iota + selects.
    @pl.when(rem_rows < tm)
    def _():
        rid = lax.broadcasted_iota(jnp.int32, (tm, LANE), 0)
        _compute(rid < rem_rows)


def _round_down(x, m):
    return (x // m) * m


def _detect_num_tensorcores():
    """Best-effort TensorCore count (2 on v7x, 1 on v5e/v6e)."""
    try:
        info = pltpu.get_tpu_info()
    except Exception:
        return 1
    for name in ("num_cores", "core_count", "tensorcore_count",
                 "num_tensorcores", "cores_per_chip"):
        v = getattr(info, name, None)
        if isinstance(v, int) and v >= 1:
            return int(v)
    return 1


def _jax_loss_terms(pred_f, gt_f, m_f, beta):
    """Plain-JAX elementwise loss (ragged tail / tiny-input fallback)."""
    if m_f is None:
        diff = jnp.abs(pred_f - gt_f)
    else:
        diff = jnp.abs(pred_f - gt_f) * jnp.abs(m_f)
    return _piecewise(diff, beta)


def masked_smooth_l1_loss(pred, gt, mask=None, *, beta=1.0, eps=1e-6,
                          block_rows=8192, num_parallel=None):
    """Scalar masked smooth-L1 loss. All heavy elementwise + reduction work is
    one Pallas kernel; only a tiny (P,8,128) sum + divide stays in XLA."""
    assert pred.shape == gt.shape and pred.size > 0
    if mask is not None:
        assert mask.shape == gt.shape
    if beta == 0:                          # mirror torch>=1.13 behaviour
        beta = beta + eps
    beta = float(beta)

    n = int(pred.size)
    assert n < (1 << 37), "row-index arithmetic in the kernel uses int32"
    has_mask = mask is not None

    # ---- dtype handling / flattening (no jnp.pad of the full tensor) -------
    def _prep(a, is_mask=False):
        if is_mask and a.dtype == jnp.bool_:
            a = a.astype(jnp.bfloat16)        # 0/1 exact, half the bytes of f32
        elif a.dtype not in (jnp.float32, jnp.bfloat16):
            a = a.astype(jnp.float32)
        return a.reshape(-1)

    flats = [_prep(pred), _prep(gt)]
    mask_abs = True
    if has_mask:
        mask_abs = not (mask.dtype == jnp.bool_
                        or jnp.issubdtype(mask.dtype, jnp.unsignedinteger))
        flats.append(_prep(mask, is_mask=True))

    rows = n // LANE
    tail = n - rows * LANE
    granule = 16 if any(f.dtype == jnp.bfloat16 for f in flats) else SUBLANE

    loss_sum = jnp.float32(0.0)
    mask_sum = jnp.float32(0.0)

    # ---- main body: Pallas streaming kernel over the 128-aligned prefix ----
    if rows >= granule:
        prefix = [f if tail == 0 else f[: rows * LANE] for f in flats]
        inputs = [f.reshape(rows, LANE) for f in prefix]
        # NOTE: for ragged n the prefix slice may materialize an XLA copy; the
        # aligned (common) case is a pure reshape.

        bytes_per_row = sum(LANE * a.dtype.itemsize for a in inputs)
        # ~12 MiB double-buffered-input budget => f32: 4096 rows, bf16: 8192.
        tm_budget = (12 * 1024 * 1024) // (2 * bytes_per_row)
        tm = min(int(block_rows), int(tm_budget), rows)
        tm = max(granule, _round_down(tm, granule))

        total_blocks = -(-rows // tm)
        ncores = (_detect_num_tensorcores() if num_parallel is None
                  else int(num_parallel))
        p_axis = max(1, min(ncores, total_blocks))
        steps = -(-total_blocks // p_axis)
        grid = (p_axis, steps)

        def in_map(p, i):
            # Clamp so the DMA never walks past the last block; the kernel
            # zeroes duplicated overhang tiles via the un-clamped flat index.
            return (jnp.minimum(p * steps + i, total_blocks - 1), 0)

        in_spec = pl.BlockSpec((tm, LANE), in_map)
        out_spec = pl.BlockSpec((1, SUBLANE, LANE), lambda p, i: (p, 0, 0))
        out_sds = jax.ShapeDtypeStruct((p_axis, SUBLANE, LANE), jnp.float32)
        n_out = 2 if has_mask else 1

        kernel = functools.partial(
            _smooth_l1_kernel, beta=beta, rows=rows, tm=tm, steps=steps,
            has_mask=has_mask, mask_abs=mask_abs)

        def _run(dim_sems):
            return pl.pallas_call(
                kernel,
                out_shape=tuple([out_sds] * n_out),
                grid_spec=pltpu.PrefetchScalarGridSpec(
                    num_scalar_prefetch=0,
                    grid=grid,
                    in_specs=[in_spec] * len(inputs),
                    out_specs=[out_spec] * n_out,
                ),
                compiler_params=pltpu.CompilerParams(
                    dimension_semantics=dim_sems,
                    vmem_limit_bytes=40 * 1024 * 1024),
            )(*inputs)

        if p_axis > 1:
            # Genuinely shard the leading axis across the TensorCores (v7x).
            try:
                outs = _run((pltpu.CORE_PARALLEL, pltpu.ARBITRARY))
            except Exception:
                outs = _run(("arbitrary", "arbitrary"))
        else:
            outs = _run(("arbitrary", "arbitrary"))

        if has_mask:
            loss_part, msum_part = outs
            mask_sum = mask_sum + jnp.sum(msum_part)
        else:
            (loss_part,) = outs
        loss_sum = loss_sum + jnp.sum(loss_part)
        tail_start = rows * LANE
    else:
        # Tiny input (< one aligned row-granule): plain JAX handles it all.
        tail_start = 0
        tail = n

    # ---- <=127-element ragged tail (or tiny-input fallback) in plain JAX ---
    if tail:
        pt = flats[0][tail_start:].astype(jnp.float32)
        gtt = flats[1][tail_start:].astype(jnp.float32)
        mt = flats[2][tail_start:].astype(jnp.float32) if has_mask else None
        loss_sum = loss_sum + jnp.sum(_jax_loss_terms(pt, gtt, mt, beta))
        if has_mask:
            mask_sum = mask_sum + jnp.sum(mt)

    if has_mask:
        denom = mask_sum + eps
    else:
        # ones-mask sum == numel (exact; the reference's f32 sum of a ones
        # tensor can differ in the last bits only for n > 2**24).
        denom = jnp.float32(float(n) + eps)

    return (loss_sum / denom).astype(jnp.float32)


def _reference(pred, gt, mask, beta=1.0, eps=1e-6):
    if mask is None:
        mask = jnp.ones_like(gt)
    mask = mask.astype(jnp.float32) if mask.dtype == jnp.bool_ else mask
    x = pred * mask
    y = gt * mask
    diff = jnp.abs(x - y)
    loss = jnp.where(diff < beta, 0.5 * diff * diff / beta, diff - 0.5 * beta)
    return loss.sum() / (mask.sum() + eps)


if __name__ == "__main__":
    key = jax.random.PRNGKey(0)
    k1, k2, k3 = jax.random.split(key, 3)

    # NCHW-style input, same shape for pred / gt / mask
    shape = (2, 4, 16, 16)
    pred = jax.random.normal(k1, shape, dtype=jnp.float32) * 2.0
    gt = jax.random.normal(k2, shape, dtype=jnp.float32) * 2.0
    mask = (jax.random.uniform(k3, shape) > 0.5).astype(jnp.float32)

    beta, eps = 1.0, 1e-6

    # 1) float mask
    out = jax.block_until_ready(
        masked_smooth_l1_loss(pred, gt, mask, beta=beta, eps=eps))
    ref = _reference(pred, gt, mask, beta=beta, eps=eps)
    assert jnp.allclose(out, ref, rtol=1e-5, atol=1e-5), (out, ref)

    # 2) mask=None (no ones tensor is ever materialized or streamed)
    out2 = jax.block_until_ready(
        masked_smooth_l1_loss(pred, gt, None, beta=beta, eps=eps))
    ref2 = _reference(pred, gt, None, beta=beta, eps=eps)
    assert jnp.allclose(out2, ref2, rtol=1e-5, atol=1e-5), (out2, ref2)

    # 3) ragged numel: aligned prefix in the kernel (cold partial-tile path)
    #    + <=127-element tail in plain JAX
    shape3 = (2, 3, 17, 19)   # 1938 elements
    p3 = jax.random.normal(k1, shape3, dtype=jnp.float32)
    g3 = jax.random.normal(k2, shape3, dtype=jnp.float32)
    m3 = (jax.random.uniform(k3, shape3) > 0.5).astype(jnp.float32)
    out3 = jax.block_until_ready(
        masked_smooth_l1_loss(p3, g3, m3, beta=beta, eps=eps))
    ref3 = _reference(p3, g3, m3, beta=beta, eps=eps)
    assert jnp.allclose(out3, ref3, rtol=1e-5, atol=1e-5), (out3, ref3)

    # 4) bf16 pred/gt streamed as bf16, upcast in-register inside the kernel
    pred_bf = pred.astype(jnp.bfloat16)
    gt_bf = gt.astype(jnp.bfloat16)
    out4 = jax.block_until_ready(
        masked_smooth_l1_loss(pred_bf, gt_bf, mask, beta=beta, eps=eps))
    ref4 = _reference(pred_bf.astype(jnp.float32), gt_bf.astype(jnp.float32),
                      mask, beta=beta, eps=eps)
    assert jnp.allclose(out4, ref4, rtol=1e-3, atol=1e-3), (out4, ref4)

    # 5) bool mask: streamed as bf16 (0/1 exact), abs skipped in-kernel
    mask_b = jax.random.uniform(k3, shape) > 0.5
    out5 = jax.block_until_ready(
        masked_smooth_l1_loss(pred, gt, mask_b, beta=beta, eps=eps))
    ref5 = _reference(pred, gt, mask_b, beta=beta, eps=eps)
    assert jnp.allclose(out5, ref5, rtol=1e-5, atol=1e-5), (out5, ref5)

    print("KERNEL_OK")
</pallas_src>

<mosaic_0001>
module attributes {stable_mosaic.version = 11 : i64} {
  func.func @_smooth_l1_kernel(%arg0: i32, %arg1: i32, %arg2: memref<16x128xf32, #tpu.memory_space<vmem>>, %arg3: memref<16x128xf32, #tpu.memory_space<vmem>>, %arg4: memref<16x128xf32, #tpu.memory_space<vmem>>, %arg5: memref<1x8x128xf32, #tpu.memory_space<vmem>>, %arg6: memref<1x8x128xf32, #tpu.memory_space<vmem>>) attributes {dimension_semantics = [#tpu.dimension_semantics<arbitrary>, #tpu.dimension_semantics<arbitrary>], iteration_bounds = array<i64: 1, 1>, scalar_prefetch = 0 : i64, scratch_operands = 0 : i64, tpu.core_type = #tpu.core_type<tc>, window_params = [{transform_indices = @transform_0, window_bounds = array<i64: 16, 128>}, {transform_indices = @transform_1, window_bounds = array<i64: 16, 128>}, {transform_indices = @transform_2, window_bounds = array<i64: 16, 128>}, {transform_indices = @transform_3, window_bounds = array<i64: 1, 8, 128>}, {transform_indices = @transform_4, window_bounds = array<i64: 1, 8, 128>}]} {
    %c0_i32 = arith.constant 0 : i32
    %0 = arith.cmpi eq, %arg1, %c0_i32 : i32
    %1 = arith.extui %0 : i1 to i32
    %c0_i32_0 = arith.constant 0 : i32
    %2 = arith.cmpi ne, %1, %c0_i32_0 : i32
    scf.if %2 {
      %cst = arith.constant 0.000000e+00 : f32
      %13 = vector.broadcast %cst : f32 to vector<1x8x128xf32>
      %c0 = arith.constant 0 : index
      %c0_6 = arith.constant 0 : index
      %c0_7 = arith.constant 0 : index
      %14 = vector.load %arg5[%c0, %c0_6, %c0_7] : memref<1x8x128xf32, #tpu.memory_space<vmem>>, vector<1x8x128xf32>
      tpu.vector_store %arg5[%c0, %c0_6, %c0_7], %13 {strides = array<i32>} : memref<1x8x128xf32, #tpu.memory_space<vmem>>, vector<1x8x128xf32>,
      %cst_8 = arith.constant 0.000000e+00 : f32
      %15 = vector.broadcast %cst_8 : f32 to vector<1x8x128xf32>
      %c0_9 = arith.constant 0 : index
      %c0_10 = arith.constant 0 : index
      %c0_11 = arith.constant 0 : index
      %16 = vector.load %arg6[%c0_9, %c0_10, %c0_11] : memref<1x8x128xf32, #tpu.memory_space<vmem>>, vector<1x8x128xf32>
      tpu.vector_store %arg6[%c0_9, %c0_10, %c0_11], %15 {strides = array<i32>} : memref<1x8x128xf32, #tpu.memory_space<vmem>>, vector<1x8x128xf32>,
    } else {
    }
    %c1_i32 = arith.constant 1 : i32
    %3 = arith.muli %arg0, %c1_i32 : i32
    %4 = arith.addi %3, %arg1 : i32
    %c16_i32 = arith.constant 16 : i32
    %5 = arith.muli %4, %c16_i32 : i32
    %c16_i32_1 = arith.constant 16 : i32
    %6 = arith.subi %c16_i32_1, %5 : i32
    %c16_i32_2 = arith.constant 16 : i32
    %7 = arith.cmpi sge, %6, %c16_i32_2 : i32
    %8 = arith.extui %7 : i1 to i32
    %c0_i32_3 = arith.constant 0 : i32
    %9 = arith.cmpi ne, %8, %c0_i32_3 : i32
    scf.if %9 {
      %c0 = arith.constant 0 : index
      %c0_6 = arith.constant 0 : index
      %13 = vector.load %arg2[%c0, %c0_6] : memref<16x128xf32, #tpu.memory_space<vmem>>, vector<16x128xf32>
      %c0_7 = arith.constant 0 : index
      %c0_8 = arith.constant 0 : index
      %14 = vector.load %arg3[%c0_7, %c0_8] : memref<16x128xf32, #tpu.memory_space<vmem>>, vector<16x128xf32>
      %c0_9 = arith.constant 0 : index
      %c0_10 = arith.constant 0 : index
      %15 = vector.load %arg4[%c0_9, %c0_10] : memref<16x128xf32, #tpu.memory_space<vmem>>, vector<16x128xf32>
      %16 = math.absf %15 : vector<16x128xf32>
      %17 = arith.subf %13, %14 : vector<16x128xf32>
      %18 = math.absf %17 : vector<16x128xf32>
      %19 = arith.mulf %18, %16 : vector<16x128xf32>
      %cst = arith.constant 1.000000e+00 : f32
      %20 = vector.broadcast %cst : f32 to vector<16x128xf32>
      %21 = arith.cmpf olt, %19, %20 : vector<16x128xf32>
      %22 = arith.mulf %19, %19 : vector<16x128xf32>
      %cst_11 = arith.constant 5.000000e-01 : f32
      %23 = vector.broadcast %cst_11 : f32 to vector<16x128xf32>
      %24 = arith.mulf %22, %23 : vector<16x128xf32>
      %cst_12 = arith.constant 5.000000e-01 : f32
      %25 = vector.broadcast %cst_12 : f32 to vector<16x128xf32>
      %26 = arith.subf %19, %25 : vector<16x128xf32>
      %27 = arith.select %21, %24, %26 : vector<16x128xi1>, vector<16x128xf32>
      %c0_13 = arith.constant 0 : index
      %c0_14 = arith.constant 0 : index
      %c0_15 = arith.constant 0 : index
      %28 = vector.load %arg5[%c0_13, %c0_14, %c0_15] : memref<1x8x128xf32, #tpu.memory_space<vmem>>, vector<1x8x128xf32>
      %29 = vector.shape_cast %27 : vector<16x128xf32> to vector<2x8x128xf32>
      %cst_16 = arith.constant dense<0.000000e+00> : vector<8x128xf32>
      %30 = vector.multi_reduction <add>, %29, %cst_16 [0] : vector<2x8x128xf32> to vector<8x128xf32>
      %31 = vector.shape_cast %30 : vector<8x128xf32> to vector<1x8x128xf32>
      %32 = arith.addf %28, %31 : vector<1x8x128xf32>
      %c0_17 = arith.constant 0 : index
      %c0_18 = arith.constant 0 : index
      %c0_19 = arith.constant 0 : index
      %33 = vector.load %arg5[%c0_17, %c0_18, %c0_19] : memref<1x8x128xf32, #tpu.memory_space<vmem>>, vector<1x8x128xf32>
      tpu.vector_store %arg5[%c0_17, %c0_18, %c0_19], %32 {strides = array<i32>} : memref<1x8x128xf32, #tpu.memory_space<vmem>>, vector<1x8x128xf32>,
      %c0_20 = arith.constant 0 : index
      %c0_21 = arith.constant 0 : index
      %c0_22 = arith.constant 0 : index
      %34 = vector.load %arg6[%c0_20, %c0_21, %c0_22] : memref<1x8x128xf32, #tpu.memory_space<vmem>>, vector<1x8x128xf32>
      %35 = vector.shape_cast %15 : vector<16x128xf32> to vector<2x8x128xf32>
      %cst_23 = arith.constant dense<0.000000e+00> : vector<8x128xf32>
      %36 = vector.multi_reduction <add>, %35, %cst_23 [0] : vector<2x8x128xf32> to vector<8x128xf32>
      %37 = vector.shape_cast %36 : vector<8x128xf32> to vector<1x8x128xf32>
      %38 = arith.addf %34, %37 : vector<1x8x128xf32>
      %c0_24 = arith.constant 0 : index
      %c0_25 = arith.constant 0 : index
      %c0_26 = arith.constant 0 : index
      %39 = vector.load %arg6[%c0_24, %c0_25, %c0_26] : memref<1x8x128xf32, #tpu.memory_space<vmem>>, vector<1x8x128xf32>
      tpu.vector_store %arg6[%c0_24, %c0_25, %c0_26], %38 {strides = array<i32>} : memref<1x8x128xf32, #tpu.memory_space<vmem>>, vector<1x8x128xf32>,
    } else {
    }
    %c16_i32_4 = arith.constant 16 : i32
    %10 = arith.cmpi slt, %6, %c16_i32_4 : i32
    %11 = arith.extui %10 : i1 to i32
    %c0_i32_5 = arith.constant 0 : i32
    %12 = arith.cmpi ne, %11, %c0_i32_5 : i32
    scf.if %12 {
      %13 = tpu.iota {dimensions = array<i32: 0>} : vector<16x128xi32>
      %14 = vector.broadcast %6 : i32 to vector<16x128xi32>
      %15 = arith.cmpi slt, %13, %14 : vector<16x128xi32>
      %c0 = arith.constant 0 : index
      %c0_6 = arith.constant 0 : index
      %16 = vector.load %arg2[%c0, %c0_6] : memref<16x128xf32, #tpu.memory_space<vmem>>, vector<16x128xf32>
      %c0_7 = arith.constant 0 : index
      %c0_8 = arith.constant 0 : index
      %17 = vector.load %arg3[%c0_7, %c0_8] : memref<16x128xf32, #tpu.memory_space<vmem>>, vector<16x128xf32>
      %c0_9 = arith.constant 0 : index
      %c0_10 = arith.constant 0 : index
      %18 = vector.load %arg4[%c0_9, %c0_10] : memref<16x128xf32, #tpu.memory_space<vmem>>, vector<16x128xf32>
      %19 = math.absf %18 : vector<16x128xf32>
      %20 = arith.subf %16, %17 : vector<16x128xf32>
      %21 = math.absf %20 : vector<16x128xf32>
      %22 = arith.mulf %21, %19 : vector<16x128xf32>
      %cst = arith.constant 1.000000e+00 : f32
      %23 = vector.broadcast %cst : f32 to vector<16x128xf32>
      %24 = arith.cmpf olt, %22, %23 : vector<16x128xf32>
      %25 = arith.mulf %22, %22 : vector<16x128xf32>
      %cst_11 = arith.constant 5.000000e-01 : f32
      %26 = vector.broadcast %cst_11 : f32 to vector<16x128xf32>
      %27 = arith.mulf %25, %26 : vector<16x128xf32>
      %cst_12 = arith.constant 5.000000e-01 : f32
      %28 = vector.broadcast %cst_12 : f32 to vector<16x128xf32>
      %29 = arith.subf %22, %28 : vector<16x128xf32>
      %30 = arith.select %24, %27, %29 : vector<16x128xi1>, vector<16x128xf32>
      %cst_13 = arith.constant 0.000000e+00 : f32
      %31 = vector.broadcast %cst_13 : f32 to vector<16x128xf32>
      %32 = arith.select %15, %30, %31 : vector<16x128xi1>, vector<16x128xf32>
      %c0_14 = arith.constant 0 : index
      %c0_15 = arith.constant 0 : index
      %c0_16 = arith.constant 0 : index
      %33 = vector.load %arg5[%c0_14, %c0_15, %c0_16] : memref<1x8x128xf32, #tpu.memory_space<vmem>>, vector<1x8x128xf32>
      %34 = vector.shape_cast %32 : vector<16x128xf32> to vector<2x8x128xf32>
      %cst_17 = arith.constant dense<0.000000e+00> : vector<8x128xf32>
      %35 = vector.multi_reduction <add>, %34, %cst_17 [0] : vector<2x8x128xf32> to vector<8x128xf32>
      %36 = vector.shape_cast %35 : vector<8x128xf32> to vector<1x8x128xf32>
      %37 = arith.addf %33, %36 : vector<1x8x128xf32>
      %c0_18 = arith.constant 0 : index
      %c0_19 = arith.constant 0 : index
      %c0_20 = arith.constant 0 : index
      %38 = vector.load %arg5[%c0_18, %c0_19, %c0_20] : memref<1x8x128xf32, #tpu.memory_space<vmem>>, vector<1x8x128xf32>
      tpu.vector_store %arg5[%c0_18, %c0_19, %c0_20], %37 {strides = array<i32>} : memref<1x8x128xf32, #tpu.memory_space<vmem>>, vector<1x8x128xf32>,
      %cst_21 = arith.constant 0.000000e+00 : f32
      %39 = vector.broadcast %cst_21 : f32 to vector<16x128xf32>
      %40 = arith.select %15, %18, %39 : vector<16x128xi1>, vector<16x128xf32>
      %c0_22 = arith.constant 0 : index
      %c0_23 = arith.constant 0 : index
      %c0_24 = arith.constant 0 : index
      %41 = vector.load %arg6[%c0_22, %c0_23, %c0_24] : memref<1x8x128xf32, #tpu.memory_space<vmem>>, vector<1x8x128xf32>
      %42 = vector.shape_cast %40 : vector<16x128xf32> to vector<2x8x128xf32>
      %cst_25 = arith.constant dense<0.000000e+00> : vector<8x128xf32>
      %43 = vector.multi_reduction <add>, %42, %cst_25 [0] : vector<2x8x128xf32> to vector<8x128xf32>
      %44 = vector.shape_cast %43 : vector<8x128xf32> to vector<1x8x128xf32>
      %45 = arith.addf %41, %44 : vector<1x8x128xf32>
      %c0_26 = arith.constant 0 : index
      %c0_27 = arith.constant 0 : index
      %c0_28 = arith.constant 0 : index
      %46 = vector.load %arg6[%c0_26, %c0_27, %c0_28] : memref<1x8x128xf32, #tpu.memory_space<vmem>>, vector<1x8x128xf32>
      tpu.vector_store %arg6[%c0_26, %c0_27, %c0_28], %45 {strides = array<i32>} : memref<1x8x128xf32, #tpu.memory_space<vmem>>, vector<1x8x128xf32>,
    } else {
    }
    return
  }
  func.func @transform_0(%arg0: i32, %arg1: i32) -> (i32, i32) {
    %c1_i32 = arith.constant 1 : i32
    %0 = arith.muli %arg0, %c1_i32 : i32
    %1 = arith.addi %0, %arg1 : i32
    %c0_i32 = arith.constant 0 : i32
    %2 = arith.minsi %1, %c0_i32 : i32
    %c0_i32_0 = arith.constant 0 : i32
    %c0_i32_1 = arith.constant 0 : i32
    return %2, %c0_i32_0 : i32, i32
  }
  func.func @transform_1(%arg0: i32, %arg1: i32) -> (i32, i32) {
    %c1_i32 = arith.constant 1 : i32
    %0 = arith.muli %arg0, %c1_i32 : i32
    %1 = arith.addi %0, %arg1 : i32
    %c0_i32 = arith.constant 0 : i32
    %2 = arith.minsi %1, %c0_i32 : i32
    %c0_i32_0 = arith.constant 0 : i32
    %c0_i32_1 = arith.constant 0 : i32
    return %2, %c0_i32_0 : i32, i32
  }
  func.func @transform_2(%arg0: i32, %arg1: i32) -> (i32, i32) {
    %c1_i32 = arith.constant 1 : i32
    %0 = arith.muli %arg0, %c1_i32 : i32
    %1 = arith.addi %0, %arg1 : i32
    %c0_i32 = arith.constant 0 : i32
    %2 = arith.minsi %1, %c0_i32 : i32
    %c0_i32_0 = arith.constant 0 : i32
    %c0_i32_1 = arith.constant 0 : i32
    return %2, %c0_i32_0 : i32, i32
  }
  func.func @transform_3(%arg0: i32, %arg1: i32) -> (i32, i32, i32) {
    %c0_i32 = arith.constant 0 : i32
    %c0_i32_0 = arith.constant 0 : i32
    %c0_i32_1 = arith.constant 0 : i32
    return %arg0, %c0_i32, %c0_i32_0 : i32, i32, i32
  }
  func.func @transform_4(%arg0: i32, %arg1: i32) -> (i32, i32, i32) {
    %c0_i32 = arith.constant 0 : i32
    %c0_i32_0 = arith.constant 0 : i32
    %c0_i32_1 = arith.constant 0 : i32
    return %arg0, %c0_i32, %c0_i32_0 : i32, i32, i32
  }
}

</mosaic_0001>

<llo_original>
// kernel: tpu_custom_call.1
$region0: #{tpu_custom_call.1}
  #allocation0 [shape = 'u32[]', space=smem, size = 0x4, offset = 0x4, fixed_abs, tag = 'smem constant byte address 0x4 - core index']
  #allocation1 [shape = 'u32[144,128]{1,0:T(1,128)}', space=vmem, size = 0x12000, scoped, tag = 'internal scratch']
  %s0 = inlined_call_operand.hbm [shape: f32[16,128], index: 0, kind: input, shape index: {}]
  %s1 = inlined_call_operand.hbm [shape: f32[16,128], index: 1, kind: input, shape index: {}]
  %s2 = inlined_call_operand.hbm [shape: f32[16,128], index: 2, kind: input, shape index: {}]
  %s3 = inlined_call_operand.hbm [shape: f32[1,8,128], index: 3, kind: output, shape index: {0}]
  %s4 = inlined_call_operand.hbm [shape: f32[1,8,128], index: 4, kind: output, shape index: {1}]
  %5 = xla_tuple %s3, %s4
  %s6 = sld [smem:[#allocation0]]
  $region54: #{tpu_custom_call.1} parent=0
    _
  %s8 = ssub.s32 1, %s6
  %s9 = scalar_select 0, %s8, %s6
  $region1: #{tpu_custom_call.1} parent=0
    #allocation2 [shape = 'u8[8192]{0}', space=vmem, size = 0x2000, scoped, tag = 'input window, operand 0, single buffered']
    #allocation3 [shape = 's32[1]{0}', space=sflag, size = 0x4, scoped, tag = 'scoped memory for tpu_custom_call.1']
    #allocation4 [shape = 's32[1]{0}', space=sflag, size = 0x4, scoped, tag = 'scoped memory for tpu_custom_call.1']
    #allocation5 [shape = 'u8[8192]{0}', space=vmem, size = 0x2000, scoped, tag = 'input window, operand 1, single buffered']
    #allocation6 [shape = 's32[1]{0}', space=sflag, size = 0x4, scoped, tag = 'scoped memory for tpu_custom_call.1']
    #allocation7 [shape = 'u8[8192]{0}', space=vmem, size = 0x2000, scoped, tag = 'input window, operand 2, single buffered']
    #allocation8 [shape = 'u8[4096]{0}', space=vmem, size = 0x1000, scoped, tag = 'output window, operand 0, single buffered']
    #allocation9 [shape = 'u8[4096]{0}', space=vmem, size = 0x1000, scoped, tag = 'output window, operand 1, single buffered']
    #allocation10 [shape = 's32[1]{0}', space=sflag, size = 0x4, scoped, tag = 'scoped memory for tpu_custom_call.1']
    %10 = vsyncpa [#allocation3], 0
    %11 = vsyncpa [#allocation6], 0
    %12 = vsyncpa [#allocation4], 0
    %13 = vsyncpa [#allocation10], 0
    // Predicated region
    $region2: #{tpu_custom_call.1} parent=1 // pred_check
      _
    $region3: #{tpu_custom_call.1} parent=1 // pred_check_branch
      %15 = sbr.rel (0) target = $region5
    $region4: #{tpu_custom_call.1} parent=1 // pred_region
      %s16 = sadd.s32 0, 0
      %p17 = scmp.lt.s32.totalorder %s16, 0
      %s18 = scalar_select %p17, %s16, 0
      %s19 = smul.u32 2, %s18
      %s21 = ssub.s32 256, 256
      %22 = vsyncadd [#allocation3], %s21
      %s23 = smul.addr %s19, 128
      %s24 = scalar_lea.hbm %s0, %s23
      %s25 = sshll.u32 [#allocation2], 4
      %s26 = int_to_ptr.vmem [resolvable:$true] %s25
      %31 = dma.hbm_to_vmem [thread:$0]  %s24, 256, %s26, [#allocation3], 128, 128, 8
    $region5: #{tpu_custom_call.1} parent=1 // pred_fallthru
      _
    // Predicated region
    $region6: #{tpu_custom_call.1} parent=1 // pred_check
      _
    $region7: #{tpu_custom_call.1} parent=1 // pred_check_branch
      %33 = sbr.rel (0) target = $region9
    $region8: #{tpu_custom_call.1} parent=1 // pred_region
      %s34 = sadd.s32 0, 0
      %p35 = scmp.lt.s32.totalorder %s34, 0
      %s36 = scalar_select %p35, %s34, 0
      %s37 = smul.u32 2, %s36
      %s39 = ssub.s32 256, 256
      %40 = vsyncadd [#allocation6], %s39
      %s41 = smul.addr %s37, 128
      %s42 = scalar_lea.hbm %s1, %s41
      %s43 = sshll.u32 [#allocation5], 4
      %s44 = int_to_ptr.vmem [resolvable:$true] %s43
      %49 = dma.hbm_to_vmem [thread:$0]  %s42, 256, %s44, [#allocation6], 128, 128, 8
    $region9: #{tpu_custom_call.1} parent=1 // pred_fallthru
      _
    // Predicated region
    $region10: #{tpu_custom_call.1} parent=1 // pred_check
      _
    $region11: #{tpu_custom_call.1} parent=1 // pred_check_branch
      %51 = sbr.rel (0) target = $region13
    $region12: #{tpu_custom_call.1} parent=1 // pred_region
      %s52 = sadd.s32 0, 0
      %p53 = scmp.lt.s32.totalorder %s52, 0
      %s54 = scalar_select %p53, %s52, 0
      %s55 = smul.u32 2, %s54
      %s57 = ssub.s32 256, 256
      %58 = vsyncadd [#allocation6], %s57
      %s59 = smul.addr %s55, 128
      %s60 = scalar_lea.hbm %s2, %s59
      %s61 = sshll.u32 [#allocation7], 4
      %s62 = int_to_ptr.vmem [resolvable:$true] %s61
      %67 = dma.hbm_to_vmem [thread:$0]  %s60, 256, %s62, [#allocation6], 128, 128, 8
    $region13: #{tpu_custom_call.1} parent=1 // pred_fallthru
      _
    // Predicated region
    $region14: #{tpu_custom_call.1} parent=1 // pred_check
      _
    $region15: #{tpu_custom_call.1} parent=1 // pred_check_branch
      %69 = sbr.rel (0) target = $region17
    $region16: #{tpu_custom_call.1} parent=1 // pred_region
      %70 = dma.done [#allocation3], 256
    $region17: #{tpu_custom_call.1} parent=1 // pred_fallthru
      _
    // Predicated region
    $region18: #{tpu_custom_call.1} parent=1 // pred_check
      _
    $region19: #{tpu_custom_call.1} parent=1 // pred_check_branch
      %72 = sbr.rel (0) target = $region21
    $region20: #{tpu_custom_call.1} parent=1 // pred_region
      %73 = dma.done [#allocation6], 256
    $region21: #{tpu_custom_call.1} parent=1 // pred_fallthru
      _
    // Predicated region
    $region22: #{tpu_custom_call.1} parent=1 // pred_check
      _
    $region23: #{tpu_custom_call.1} parent=1 // pred_check_branch
      %75 = sbr.rel (0) target = $region25
    $region24: #{tpu_custom_call.1} parent=1 // pred_region
      %76 = dma.done [#allocation6], 256
    $region25: #{tpu_custom_call.1} parent=1 // pred_fallthru
      _
    %s77 = sadd.s32 0, 0
    %p78 = scmp.lt.s32.totalorder %s77, 0
    %s79 = scalar_select %p78, %s77, 0
    %s80 = smul.u32 2, %s79
    %s81 = sadd.s32 0, 0
    %p82 = scmp.lt.s32.totalorder %s81, 0
    %s83 = scalar_select %p82, %s81, 0
    %s84 = smul.u32 2, %s83
    %s85 = sadd.s32 0, 0
    %p86 = scmp.lt.s32.totalorder %s85, 0
    %s87 = scalar_select %p86, %s85, 0
    %s88 = smul.u32 2, %s87
    %p89 = scmp.eq.s32.totalorder 0, 0
    // Predicated region
    $region26: #{tpu_custom_call.1} parent=1 // pred_check
      %p90 = pneg %p89
    $region27: #{tpu_custom_call.1} parent=1 // pred_check_branch
      %92 = sbr.rel (%p90) target = $region29
    $region28: #{tpu_custom_call.1} parent=1 // pred_region
      %93 = vst [vmem:[#allocation8] sm:$0xff] 0.0
      %94 = vst [vmem:[#allocation9] sm:$0xff] 0.0
    $region29: #{tpu_custom_call.1} parent=1 // pred_fallthru
      _
    %s95 = sadd.s32 0, 0
    %s96 = smul.u32 %s95, 16
    %s97 = ssub.s32 16, %s96
    %p98 = scmp.ge.s32.totalorder %s97, 16
    // Predicated region
    $region30: #{tpu_custom_call.1} parent=1 // pred_check
      %p99 = pneg %p98
    $region31: #{tpu_custom_call.1} parent=1 // pred_check_branch
      %101 = sbr.rel (%p99) target = $region33
    $region32: #{tpu_custom_call.1} parent=1 // pred_region
      %v102 = vld [vmem:[#allocation2] sm:$0xff]
      %v103 = vld [vmem:[#allocation2 + $0x8] sm:$0xff]
      %v104 = vld [vmem:[#allocation5] sm:$0xff]
      %v105 = vld [vmem:[#allocation5 + $0x8] sm:$0xff]
      %v106 = vld [vmem:[#allocation7] sm:$0xff]
      %v107 = vld [vmem:[#allocation7 + $0x8] sm:$0xff]
      %v108 = vand.u32 2147483647, %v106
      %v109 = vand.u32 2147483647, %v107
      %v110 = vsub.f32 %v102, %v104
      %v111 = vsub.f32 %v103, %v105
      %v112 = vand.u32 2147483647, %v110
      %v113 = vand.u32 2147483647, %v111
      %v114 = vmul.f32 %v112, %v108
      %v115 = vmul.f32 %v113, %v109
      %vm116 = vcmp.lt.f32.partialorder %v114, 1.0
      %vm117 = vcmp.lt.f32.partialorder %v115, 1.0
      %v118 = vmul.f32 %v114, %v114
      %v119 = vmul.f32 %v115, %v115
      %v120 = vmul.f32 %v118, 0.5
      %v121 = vmul.f32 %v119, 0.5
      %v122 = vsub.f32 %v114, 0.5
      %v123 = vsub.f32 %v115, 0.5
      %v124 = vsel %vm116, %v120, %v122
      %v125 = vsel %vm117, %v121, %v123
      %v126 = vld [vmem:[#allocation8] sm:$0xff]
      %v127 = vadd.f32 %v124, %v125
      %v128 = vadd.f32 %v126, %v127
      %129 = vst [vmem:[#allocation8] sm:$0xff] %v128
      %v130 = vld [vmem:[#allocation9] sm:$0xff]
      %v131 = vadd.f32 %v106, %v107
      %v132 = vadd.f32 %v130, %v131
      %133 = vst [vmem:[#allocation9] sm:$0xff] %v132
    $region33: #{tpu_custom_call.1} parent=1 // pred_fallthru
      _
    %p134 = scmp.lt.s32.totalorder %s97, 16
    // Predicated region
    $region34: #{tpu_custom_call.1} parent=1 // pred_check
      %p135 = pneg %p134
    $region35: #{tpu_custom_call.1} parent=1 // pred_check_branch
      %137 = sbr.rel (%p135) target = $region37
    $region36: #{tpu_custom_call.1} parent=1 // pred_region
      %v138 = vlaneseq
      %v139 = vshrl.u32 %v138, 7
      %v140 = vadd.s32 %v139, 8
      %v141 = vstv %s97
      %vm142 = vcmp.lt.s32.totalorder %v139, %v141
      %vm143 = vcmp.lt.s32.totalorder %v140, %v141
      %v144 = vld [vmem:[#allocation2] sm:$0xff]
      %v145 = vld [vmem:[#allocation2 + $0x8] sm:$0xff]
      %v146 = vld [vmem:[#allocation5] sm:$0xff]
      %v147 = vld [vmem:[#allocation5 + $0x8] sm:$0xff]
      %v148 = vld [vmem:[#allocation7] sm:$0xff]
      %v149 = vld [vmem:[#allocation7 + $0x8] sm:$0xff]
      %v150 = vand.u32 2147483647, %v148
      %v151 = vand.u32 2147483647, %v149
      %v152 = vsub.f32 %v144, %v146
      %v153 = vsub.f32 %v145, %v147
      %v154 = vand.u32 2147483647, %v152
      %v155 = vand.u32 2147483647, %v153
      %v156 = vmul.f32 %v154, %v150
      %v157 = vmul.f32 %v155, %v151
      %vm158 = vcmp.lt.f32.partialorder %v156, 1.0
      %vm159 = vcmp.lt.f32.partialorder %v157, 1.0
      %v160 = vmul.f32 %v156, %v156
      %v161 = vmul.f32 %v157, %v157
      %v162 = vmul.f32 %v160, 0.5
      %v163 = vmul.f32 %v161, 0.5
      %v164 = vsub.f32 %v156, 0.5
      %v165 = vsub.f32 %v157, 0.5
      %v166 = vsel %vm158, %v162, %v164
      %v167 = vsel %vm159, %v163, %v165
      %v168 = vsel %vm142, %v166, 0.0
      %v169 = vsel %vm143, %v167, 0.0
      %v170 = vld [vmem:[#allocation8] sm:$0xff]
      %v171 = vadd.f32 %v168, %v169
      %v172 = vadd.f32 %v170, %v171
      %173 = vst [vmem:[#allocation8] sm:$0xff] %v172
      %v174 = vsel %vm142, %v148, 0.0
      %v175 = vsel %vm143, %v149, 0.0
      %v176 = vld [vmem:[#allocation9] sm:$0xff]
      %v177 = vadd.f32 %v174, %v175
      %v178 = vadd.f32 %v176, %v177
      %179 = vst [vmem:[#allocation9] sm:$0xff] %v178
    $region37: #{tpu_custom_call.1} parent=1 // pred_fallthru
      _
    // Predicated region
    $region38: #{tpu_custom_call.1} parent=1 // pred_check
      _
    $region39: #{tpu_custom_call.1} parent=1 // pred_check_branch
      %181 = sbr.rel (0) target = $region41
    $region40: #{tpu_custom_call.1} parent=1 // pred_region
      %s183 = ssub.s32 128, 128
      %184 = vsyncadd [#allocation4], %s183
      %s186 = sshll.u32 [#allocation8], 4
      %s187 = int_to_ptr.vmem [resolvable:$true] %s186
      %189 = dma.vmem_to_hbm [thread:$0]  %s187, 128, %s3, [#allocation4]
    $region41: #{tpu_custom_call.1} parent=1 // pred_fallthru
      _
    // Predicated region
    $region42: #{tpu_custom_call.1} parent=1 // pred_check
      _
    $region43: #{tpu_custom_call.1} parent=1 // pred_check_branch
      %191 = sbr.rel (0) target = $region45
    $region44: #{tpu_custom_call.1} parent=1 // pred_region
      %s193 = ssub.s32 128, 128
      %194 = vsyncadd [#allocation10], %s193
      %s196 = sshll.u32 [#allocation9], 4
      %s197 = int_to_ptr.vmem [resolvable:$true] %s196
      %199 = dma.vmem_to_hbm [thread:$0]  %s197, 128, %s4, [#allocation10]
    $region45: #{tpu_custom_call.1} parent=1 // pred_fallthru
      _
    // Predicated region
    $region46: #{tpu_custom_call.1} parent=1 // pred_check
      _
    $region47: #{tpu_custom_call.1} parent=1 // pred_check_branch
      %201 = sbr.rel (0) target = $region49
    $region48: #{tpu_custom_call.1} parent=1 // pred_region
      %202 = dma.done [#allocation4], 128
    $region49: #{tpu_custom_call.1} parent=1 // pred_fallthru
      _
    // Predicated region
    $region50: #{tpu_custom_call.1} parent=1 // pred_check
      _
    $region51: #{tpu_custom_call.1} parent=1 // pred_check_branch
      %204 = sbr.rel (0) target = $region53
    $region52: #{tpu_custom_call.1} parent=1 // pred_region
      %205 = dma.done [#allocation10], 128
    $region53: #{tpu_custom_call.1} parent=1 // pred_fallthru
      _
    %206 = vsyncpa [#allocation3], 1
    %207 = vsyncpa [#allocation6], 1
    %208 = vsyncpa [#allocation4], 1
    %209 = vsyncpa [#allocation10], 1

</llo_original>
